<compile_context>
chip_gen: v6e
topology: v6e:2x2x1
jax: 0.10.0
libtpu: 0.0.40
codegen_flags: <defaults>
</compile_context>

<pallas_src>
import math

import jax
import jax.numpy as jnp
from jax import lax
from jax.experimental import pallas as pl
from jax.experimental.pallas import tpu as pltpu


def _round_up(x, m):
    return ((x + m - 1) // m) * m


def mlp_kernel(x_ref, w1_ref, b1_ref, w2_ref, b2_ref, o_ref):
    # fc1 on the MXU: bf16 operands, f32 accumulate.
    h = jnp.dot(x_ref[...], w1_ref[...], preferred_element_type=jnp.float32)
    # bias + ReLU in f32 on the VPU (b1 is a resident (1, H_PAD) row).
    h = jnp.maximum(h + b1_ref[...], 0.0)
    # fc2: contract the hidden dim of w2 (1, H) against h (TILE_B, H) so the
    # result is a lane-dense (1, TILE_B) row (batch on lanes), avoiding a
    # width-1 masked-store output.
    h16 = h.astype(jnp.bfloat16)
    y = lax.dot_general(
        w2_ref[...], h16,
        dimension_numbers=(((1,), (1,)), ((), ())),
        preferred_element_type=jnp.float32,
    )  # (1, TILE_B)
    y = y + b2_ref[0, 0]  # scalar bias from SMEM
    # sigmoid: exp on the EUP, approx reciprocal also on the EUP (VALU-free tail).
    o_ref[...] = pl.reciprocal(1.0 + jnp.exp(-y), approx=True)


def net_forward(x, w1_t, b1, w2, b2, *, tile_b=128):
    """x: (B, n_in) f32; w1_t: (n_in, n_hidden); b1: (1, n_hidden);
    w2: (1, n_hidden)  (PyTorch fc2.weight layout); b2: (1,) or (1, 1).
    Returns (B, 1) float32."""
    B, n_in = x.shape
    n_hidden = w1_t.shape[1]

    in_pad = _round_up(n_in, 128)
    h_pad = _round_up(n_hidden, 128)
    b_pad = _round_up(B, tile_b)

    # Zero-pad and cast MXU operands to bf16 (halves DMA bytes, MXU-native).
    x_p = jnp.zeros((b_pad, in_pad), jnp.bfloat16).at[:B, :n_in].set(
        x.astype(jnp.bfloat16))
    w1_p = jnp.zeros((in_pad, h_pad), jnp.bfloat16).at[:n_in, :n_hidden].set(
        w1_t.astype(jnp.bfloat16))
    b1_p = jnp.zeros((1, h_pad), jnp.float32).at[:, :n_hidden].set(
        b1.astype(jnp.float32))
    w2_p = jnp.zeros((1, h_pad), jnp.bfloat16).at[:, :n_hidden].set(
        w2.reshape(1, n_hidden).astype(jnp.bfloat16))
    b2_s = jnp.asarray(b2, jnp.float32).reshape(1, 1)

    grid = (b_pad // tile_b,)
    out_t = pl.pallas_call(
        mlp_kernel,
        out_shape=jax.ShapeDtypeStruct((1, b_pad), jnp.float32),
        grid=grid,
        in_specs=[
            pl.BlockSpec((tile_b, in_pad), lambda i: (i, 0)),      # x tile (pipelined)
            pl.BlockSpec((in_pad, h_pad), lambda i: (0, 0)),       # W1 resident
            pl.BlockSpec((1, h_pad), lambda i: (0, 0)),            # b1 resident
            pl.BlockSpec((1, h_pad), lambda i: (0, 0)),            # W2 resident
            pl.BlockSpec(memory_space=pltpu.MemorySpace.SMEM),     # b2 scalar
        ],
        out_specs=pl.BlockSpec((1, tile_b), lambda i: (0, i)),     # lane-dense output
        compiler_params=pltpu.CompilerParams(
            dimension_semantics=("parallel",)),
    )(x_p, w1_p, b1_p, w2_p, b2_s)

    # (1, B_pad) -> (B, 1); drop padded batch rows.
    return out_t[:, :B].T


def init_linear_params(key, n_in, n_out):
    """Mimic PyTorch nn.Linear default init (uniform(-1/sqrt(fan_in), 1/sqrt(fan_in))).
    Returns weight transposed as (n_in, n_out) plus bias (1, n_out)."""
    k_w, k_b = jax.random.split(key)
    bound = 1.0 / math.sqrt(n_in)
    w_t = jax.random.uniform(k_w, (n_in, n_out), jnp.float32, -bound, bound)
    b = jax.random.uniform(k_b, (1, n_out), jnp.float32, -bound, bound)
    return w_t, b


if __name__ == "__main__":
    n_in, n_hidden, batch = 32, 32, 8

    key = jax.random.PRNGKey(0)
    k_x, k_fc1, k_fc2 = jax.random.split(key, 3)

    x = jax.random.normal(k_x, (batch, n_in), jnp.float32)
    w1_t, b1 = init_linear_params(k_fc1, n_in, n_hidden)
    w2_t, b2 = init_linear_params(k_fc2, n_hidden, 1)   # w2_t: (n_hidden, 1)
    w2 = w2_t.T                                         # PyTorch fc2.weight layout (1, n_hidden)

    out = net_forward(x, w1_t, b1, w2, b2)
    jax.block_until_ready(out)

    # Pure-JAX f32 reference; bf16 MXU operands + approx reciprocal need a
    # looser tolerance than 1e-5.
    ref = jax.nn.sigmoid(jnp.maximum(x @ w1_t + b1, 0.0) @ w2.T + b2)
    assert out.shape == (batch, 1)
    assert jnp.allclose(out, ref, atol=2e-2, rtol=2e-2)

    print("KERNEL_OK")
</pallas_src>

<mosaic_0001>
module attributes {stable_mosaic.version = 11 : i64} {
  func.func @mlp_kernel(%arg0: i32, %arg1: memref<128x128xbf16, #tpu.memory_space<vmem>>, %arg2: memref<128x128xbf16, #tpu.memory_space<vmem>>, %arg3: memref<1x128xf32, #tpu.memory_space<vmem>>, %arg4: memref<1x128xbf16, #tpu.memory_space<vmem>>, %arg5: memref<1x1xf32, #tpu.memory_space<smem>>, %arg6: memref<1x128xf32, #tpu.memory_space<vmem>>) attributes {dimension_semantics = [#tpu.dimension_semantics<parallel>], iteration_bounds = array<i64: 1>, scalar_prefetch = 0 : i64, scratch_operands = 0 : i64, tpu.core_type = #tpu.core_type<tc>, window_params = [{transform_indices = @transform_0, window_bounds = array<i64: 128, 128>}, {pipeline_mode = #tpu.pipeline_mode<synchronous>, transform_indices = @transform_1, window_bounds = array<i64: 128, 128>}, {pipeline_mode = #tpu.pipeline_mode<synchronous>, transform_indices = @transform_2, window_bounds = array<i64: 1, 128>}, {pipeline_mode = #tpu.pipeline_mode<synchronous>, transform_indices = @transform_3, window_bounds = array<i64: 1, 128>}, {transform_indices = @transform_4, window_bounds = array<i64: 1, 1>}, {transform_indices = @transform_5, window_bounds = array<i64: 1, 128>}]} {
    %c0 = arith.constant 0 : index
    %c0_0 = arith.constant 0 : index
    %0 = vector.load %arg1[%c0, %c0_0] : memref<128x128xbf16, #tpu.memory_space<vmem>>, vector<128x128xbf16>
    %c0_1 = arith.constant 0 : index
    %c0_2 = arith.constant 0 : index
    %1 = vector.load %arg2[%c0_1, %c0_2] : memref<128x128xbf16, #tpu.memory_space<vmem>>, vector<128x128xbf16>
    %cst = arith.constant dense<0.000000e+00> : vector<128x128xf32>
    %2 = tpu.matmul %0, %1, %cst {dimension_numbers = #tpu.dot_dimension_numbers<[1], [0], [0], [1], [0, 0, 1, 1], [], []>} : vector<128x128xbf16>, vector<128x128xbf16>, vector<128x128xf32> -> vector<128x128xf32>
    %c0_3 = arith.constant 0 : index
    %c0_4 = arith.constant 0 : index
    %3 = vector.load %arg3[%c0_3, %c0_4] : memref<1x128xf32, #tpu.memory_space<vmem>>, vector<1x128xf32>
    %4 = vector.broadcast %3 : vector<1x128xf32> to vector<128x128xf32>
    %5 = arith.addf %2, %4 : vector<128x128xf32>
    %cst_5 = arith.constant 0.000000e+00 : f32
    %6 = vector.broadcast %cst_5 : f32 to vector<128x128xf32>
    %7 = arith.maximumf %5, %6 : vector<128x128xf32>
    %8 = arith.truncf %7 : vector<128x128xf32> to vector<128x128xbf16>
    %c0_6 = arith.constant 0 : index
    %c0_7 = arith.constant 0 : index
    %9 = vector.load %arg4[%c0_6, %c0_7] : memref<1x128xbf16, #tpu.memory_space<vmem>>, vector<1x128xbf16>
    %cst_8 = arith.constant dense<0.000000e+00> : vector<1x128xf32>
    %10 = tpu.matmul %9, %8, %cst_8 {dimension_numbers = #tpu.dot_dimension_numbers<[1], [1], [0], [0], [0, 0, 1, 0], [], []>} : vector<1x128xbf16>, vector<128x128xbf16>, vector<1x128xf32> -> vector<1x128xf32>
    %c0_9 = arith.constant 0 : index
    %c0_10 = arith.constant 0 : index
    %11 = memref.load %arg5[%c0_9, %c0_10] : memref<1x1xf32, #tpu.memory_space<smem>>
    %12 = vector.broadcast %11 : f32 to vector<1x128xf32>
    %13 = arith.addf %10, %12 : vector<1x128xf32>
    %cst_11 = arith.constant 0.000000e+00 : f32
    %14 = vector.broadcast %cst_11 : f32 to vector<1x128xf32>
    %15 = arith.subf %14, %13 : vector<1x128xf32>
    %16 = math.exp %15 : vector<1x128xf32>
    %cst_12 = arith.constant 1.000000e+00 : f32
    %17 = vector.broadcast %cst_12 : f32 to vector<1x128xf32>
    %18 = arith.addf %17, %16 : vector<1x128xf32>
    %19 = tpu.reciprocal %18 {approx = true} : vector<1x128xf32> -> vector<1x128xf32>
    %c0_13 = arith.constant 0 : index
    %c0_14 = arith.constant 0 : index
    %20 = vector.load %arg6[%c0_13, %c0_14] : memref<1x128xf32, #tpu.memory_space<vmem>>, vector<1x128xf32>
    tpu.vector_store %arg6[%c0_13, %c0_14], %19 {strides = array<i32>} : memref<1x128xf32, #tpu.memory_space<vmem>>, vector<1x128xf32>,
    return
  }
  func.func @transform_0(%arg0: i32) -> (i32, i32) {
    %c0_i32 = arith.constant 0 : i32
    %c0_i32_0 = arith.constant 0 : i32
    return %arg0, %c0_i32 : i32, i32
  }
  func.func @transform_1(%arg0: i32) -> (i32, i32) {
    %c0_i32 = arith.constant 0 : i32
    %c0_i32_0 = arith.constant 0 : i32
    %c0_i32_1 = arith.constant 0 : i32
    return %c0_i32, %c0_i32_0 : i32, i32
  }
  func.func @transform_2(%arg0: i32) -> (i32, i32) {
    %c0_i32 = arith.constant 0 : i32
    %c0_i32_0 = arith.constant 0 : i32
    %c0_i32_1 = arith.constant 0 : i32
    return %c0_i32, %c0_i32_0 : i32, i32
  }
  func.func @transform_3(%arg0: i32) -> (i32, i32) {
    %c0_i32 = arith.constant 0 : i32
    %c0_i32_0 = arith.constant 0 : i32
    %c0_i32_1 = arith.constant 0 : i32
    return %c0_i32, %c0_i32_0 : i32, i32
  }
  func.func @transform_4(%arg0: i32) -> (i32, i32) {
    %c0_i32 = arith.constant 0 : i32
    %c0_i32_0 = arith.constant 0 : i32
    %c0_i32_1 = arith.constant 0 : i32
    return %c0_i32, %c0_i32_0 : i32, i32
  }
  func.func @transform_5(%arg0: i32) -> (i32, i32) {
    %c0_i32 = arith.constant 0 : i32
    %c0_i32_0 = arith.constant 0 : i32
    return %c0_i32, %arg0 : i32, i32
  }
}

</mosaic_0001>

<llo_original>
// kernel: tpu_custom_call.1
$region0: #{tpu_custom_call.1}
  #allocation0 [shape = 'u32[]', space=smem, size = 0x4, offset = 0x4, fixed_abs, tag = 'smem constant byte address 0x4 - core index']
  #allocation1 [shape = 'u32[144,128]{1,0:T(1,128)}', space=vmem, size = 0x12000, scoped, tag = 'internal scratch']
  #allocation2 [shape = 'f32[1,1]{1,0:T(1,128)S(6)}', space=smem, size = 0x200, scoped, tag = 'scoped memory for tpu_custom_call.1']
  %s0 = inlined_call_operand.hbm [shape: bf16[128,128], index: 0, kind: input, shape index: {}]
  %s1 = inlined_call_operand.hbm [shape: bf16[128,128], index: 1, kind: input, shape index: {}]
  %s2 = inlined_call_operand.vmem [shape: f32[1,128], index: 2, kind: input, shape index: {}]
  %s3 = inlined_call_operand.vmem [shape: bf16[1,128], index: 3, kind: input, shape index: {}]
  %s4 = inlined_call_operand.<no memory space> [shape: f32[1,1], index: 4, kind: input, shape index: {}]
  %s5 = inlined_call_operand.hbm [shape: f32[1,128], index: 5, kind: output, shape index: {}]
  %s6 = sld [smem:[#allocation0]]
  $region38: #{tpu_custom_call.1} parent=0
    _
  %s8 = ssub.s32 1, %s6
  %s9 = scalar_select 0, %s8, %s6
  %10 = sst [smem:[#allocation2]] %s4
  $region1: #{tpu_custom_call.1} parent=0
    #allocation3 [shape = 'u8[32768]{0}', space=vmem, size = 0x8000, scoped, tag = 'input window, operand 0, single buffered']
    #allocation4 [shape = 's32[1]{0}', space=sflag, size = 0x4, scoped, tag = 'scoped memory for tpu_custom_call.1']
    #allocation5 [shape = 's32[1]{0}', space=sflag, size = 0x4, scoped, tag = 'scoped memory for tpu_custom_call.1']
    #allocation6 [shape = 'u8[32768]{0}', space=vmem, size = 0x8000, scoped, tag = 'input window, operand 1, single buffered']
    #allocation7 [shape = 's32[1]{0}', space=sflag, size = 0x4, scoped, tag = 'scoped memory for tpu_custom_call.1']
    #allocation8 [shape = 'u8[512]{0}', space=vmem, size = 0x400, scoped, tag = 'output window, operand 0, single buffered']
    %11 = vsyncpa [#allocation4], 0
    %12 = vsyncpa [#allocation7], 0
    %13 = vsyncpa [#allocation5], 0
    // Predicated region
    $region2: #{tpu_custom_call.1} parent=1 // pred_check
      _
    $region3: #{tpu_custom_call.1} parent=1 // pred_check_branch
      %15 = sbr.rel (0) target = $region5
    $region4: #{tpu_custom_call.1} parent=1 // pred_region
      %s17 = ssub.s32 1024, 1024
      %18 = vsyncadd [#allocation4], %s17
      %s19 = sshll.u32 [#allocation3], 4
      %s20 = int_to_ptr.vmem [resolvable:$true] %s19
      %25 = dma.hbm_to_vmem [thread:$0]  %s0, 1024, %s20, [#allocation4], 64, 64, 4
    $region5: #{tpu_custom_call.1} parent=1 // pred_fallthru
      _
    // Predicated region
    $region6: #{tpu_custom_call.1} parent=1 // pred_check
      _
    $region7: #{tpu_custom_call.1} parent=1 // pred_check_branch
      %27 = sbr.rel (0) target = $region9
    $region8: #{tpu_custom_call.1} parent=1 // pred_region
      %s29 = ssub.s32 1024, 1024
      %30 = vsyncadd [#allocation7], %s29
      %s31 = sshll.u32 [#allocation6], 4
      %s32 = int_to_ptr.vmem [resolvable:$true] %s31
      %37 = dma.hbm_to_vmem [thread:$0]  %s1, 1024, %s32, [#allocation7], 64, 64, 4
    $region9: #{tpu_custom_call.1} parent=1 // pred_fallthru
      _
    // Predicated region
    $region10: #{tpu_custom_call.1} parent=1 // pred_check
      _
    $region11: #{tpu_custom_call.1} parent=1 // pred_check_branch
      %39 = sbr.rel (0) target = $region13
    $region12: #{tpu_custom_call.1} parent=1 // pred_region
      _
    $region13: #{tpu_custom_call.1} parent=1 // pred_fallthru
      _
    // Predicated region
    $region14: #{tpu_custom_call.1} parent=1 // pred_check
      _
    $region15: #{tpu_custom_call.1} parent=1 // pred_check_branch
      %41 = sbr.rel (0) target = $region17
    $region16: #{tpu_custom_call.1} parent=1 // pred_region
      _
    $region17: #{tpu_custom_call.1} parent=1 // pred_fallthru
      _
    // Predicated region
    $region18: #{tpu_custom_call.1} parent=1 // pred_check
      _
    $region19: #{tpu_custom_call.1} parent=1 // pred_check_branch
      %43 = sbr.rel (0) target = $region21
    $region20: #{tpu_custom_call.1} parent=1 // pred_region
      _
    $region21: #{tpu_custom_call.1} parent=1 // pred_fallthru
      _
    // Predicated region
    $region22: #{tpu_custom_call.1} parent=1 // pred_check
      _
    $region23: #{tpu_custom_call.1} parent=1 // pred_check_branch
      %45 = sbr.rel (0) target = $region25
    $region24: #{tpu_custom_call.1} parent=1 // pred_region
      %46 = dma.done [#allocation4], 1024
    $region25: #{tpu_custom_call.1} parent=1 // pred_fallthru
      _
    // Predicated region
    $region26: #{tpu_custom_call.1} parent=1 // pred_check
      _
    $region27: #{tpu_custom_call.1} parent=1 // pred_check_branch
      %48 = sbr.rel (0) target = $region29
    $region28: #{tpu_custom_call.1} parent=1 // pred_region
      %49 = dma.done [#allocation7], 1024
    $region29: #{tpu_custom_call.1} parent=1 // pred_fallthru
      _
    %v51 = vld [vmem:[#allocation3] sm:$0xf]
    %v52 = vld [vmem:[#allocation3 + $0x4] sm:$0xf]
    %v53 = vld [vmem:[#allocation3 + $0x8] sm:$0xf]
    %v54 = vld [vmem:[#allocation3 + $0xc] sm:$0xf]
    %v55 = vld [vmem:[#allocation3 + $0x10] sm:$0xf]
    %v56 = vld [vmem:[#allocation3 + $0x14] sm:$0xf]
    %v57 = vld [vmem:[#allocation3 + $0x18] sm:$0xf]
    %v58 = vld [vmem:[#allocation3 + $0x1c] sm:$0xf]
    %v59 = vld [vmem:[#allocation3 + $0x20] sm:$0xf]
    %v60 = vld [vmem:[#allocation3 + $0x24] sm:$0xf]
    %v61 = vld [vmem:[#allocation3 + $0x28] sm:$0xf]
    %v62 = vld [vmem:[#allocation3 + $0x2c] sm:$0xf]
    %v63 = vld [vmem:[#allocation3 + $0x30] sm:$0xf]
    %v64 = vld [vmem:[#allocation3 + $0x34] sm:$0xf]
    %v65 = vld [vmem:[#allocation3 + $0x38] sm:$0xf]
    %v66 = vld [vmem:[#allocation3 + $0x3c] sm:$0xf]
    %v67 = vld [vmem:[#allocation6] sm:$0xf]
    %v68 = vld [vmem:[#allocation6 + $0x4] sm:$0xf]
    %v69 = vld [vmem:[#allocation6 + $0x8] sm:$0xf]
    %v70 = vld [vmem:[#allocation6 + $0xc] sm:$0xf]
    %v71 = vld [vmem:[#allocation6 + $0x10] sm:$0xf]
    %v72 = vld [vmem:[#allocation6 + $0x14] sm:$0xf]
    %v73 = vld [vmem:[#allocation6 + $0x18] sm:$0xf]
    %v74 = vld [vmem:[#allocation6 + $0x1c] sm:$0xf]
    %v75 = vld [vmem:[#allocation6 + $0x20] sm:$0xf]
    %v76 = vld [vmem:[#allocation6 + $0x24] sm:$0xf]
    %v77 = vld [vmem:[#allocation6 + $0x28] sm:$0xf]
    %v78 = vld [vmem:[#allocation6 + $0x2c] sm:$0xf]
    %v79 = vld [vmem:[#allocation6 + $0x30] sm:$0xf]
    %v80 = vld [vmem:[#allocation6 + $0x34] sm:$0xf]
    %v81 = vld [vmem:[#allocation6 + $0x38] sm:$0xf]
    %v82 = vld [vmem:[#allocation6 + $0x3c] sm:$0xf]
    %v83 = vld [vmem:[%s2] sm:$0x1]
    %v85 = vlaneseq
    %v86 = vshrl.u32 %v85, 7
    %v87 = vsub.s32 0, %v86
    %v88 = vrot.slane %v83, %v87
    %v106 = vunpack.c.l.b16 %v51
    %v107 = vunpack.c.l.b16 %v52
    %v108 = vunpack.c.l.b16 %v53
    %v109 = vunpack.c.l.b16 %v54
    %v110 = vunpack.c.l.b16 %v55
    %v111 = vunpack.c.l.b16 %v56
    %v112 = vunpack.c.l.b16 %v57
    %v113 = vunpack.c.l.b16 %v58
    %v114 = vunpack.c.l.b16 %v59
    %v115 = vunpack.c.l.b16 %v60
    %v116 = vunpack.c.l.b16 %v61
    %v117 = vunpack.c.l.b16 %v62
    %v118 = vunpack.c.l.b16 %v63
    %v119 = vunpack.c.l.b16 %v64
    %v120 = vunpack.c.l.b16 %v65
    %v121 = vunpack.c.l.b16 %v66
    %v122 = vpack.c.b16 %v107, %v106
    %v123 = vpack.c.b16 %v109, %v108
    %v124 = vpack.c.b16 %v111, %v110
    %v125 = vpack.c.b16 %v113, %v112
    %v126 = vpack.c.b16 %v115, %v114
    %v127 = vpack.c.b16 %v117, %v116
    %v128 = vpack.c.b16 %v119, %v118
    %v129 = vpack.c.b16 %v121, %v120
    %v154 = vunpack.c.l.b16 %v67
    %v155 = vunpack.c.l.b16 %v68
    %v156 = vunpack.c.l.b16 %v69
    %v157 = vunpack.c.l.b16 %v70
    %v158 = vunpack.c.l.b16 %v71
    %v159 = vunpack.c.l.b16 %v72
    %v160 = vunpack.c.l.b16 %v73
    %v161 = vunpack.c.l.b16 %v74
    %v162 = vunpack.c.l.b16 %v75
    %v163 = vunpack.c.l.b16 %v76
    %v164 = vunpack.c.l.b16 %v77
    %v165 = vunpack.c.l.b16 %v78
    %v166 = vunpack.c.l.b16 %v79
    %v167 = vunpack.c.l.b16 %v80
    %v168 = vunpack.c.l.b16 %v81
    %v169 = vunpack.c.l.b16 %v82
    %v170 = vpack.c.b16 %v155, %v154
    %v171 = vpack.c.b16 %v157, %v156
    %v172 = vpack.c.b16 %v159, %v158
    %v173 = vpack.c.b16 %v161, %v160
    %v174 = vpack.c.b16 %v163, %v162
    %v175 = vpack.c.b16 %v165, %v164
    %v176 = vpack.c.b16 %v167, %v166
    %v177 = vpack.c.b16 %v169, %v168
    %186 = vmatprep.subr.bf16.mxu0 0
    %187 = vmatpush1.bf16.msra.mxu0 %v177
    %188 = vmatprep.subr.bf16.mxu0 0
    %189 = vmatpush1.bf16.msra.mxu0 %v176
    %190 = vmatprep.subr.bf16.mxu0 0
    %191 = vmatpush1.bf16.msra.mxu0 %v175
    %192 = vmatprep.subr.bf16.mxu0 0
    %193 = vmatpush1.bf16.msra.mxu0 %v174
    %194 = vmatprep.subr.bf16.mxu0 0
    %195 = vmatpush1.bf16.msra.mxu0 %v173
    %196 = vmatprep.subr.bf16.mxu0 0
    %197 = vmatpush1.bf16.msra.mxu0 %v172
    %198 = vmatprep.subr.bf16.mxu0 0
    %199 = vmatpush1.bf16.msra.mxu0 %v171
    %200 = vmatprep.subr.bf16.mxu0 0
    %201 = vmatpush1.bf16.msra.mxu0 %v170
    %202 = vmatprep.subr.bf16.mxu0 0
    %203 = vmatpush2.bf16.msra.mxu0 0
    %204 = vmatprep.subr.bf16.mxu0 0
    %205 = vmatpush2.bf16.msra.mxu0 0
    %206 = vmatprep.subr.bf16.mxu0 0
    %207 = vmatpush2.bf16.msra.mxu0 0
    %208 = vmatprep.subr.bf16.mxu0 0
    %209 = vmatpush2.bf16.msra.mxu0 0
    %210 = vmatprep.subr.bf16.mxu0 0
    %211 = vmatpush2.bf16.msra.mxu0 0
    %212 = vmatprep.subr.bf16.mxu0 0
    %213 = vmatpush2.bf16.msra.mxu0 0
    %214 = vmatprep.subr.bf16.mxu0 0
    %215 = vmatpush2.bf16.msra.mxu0 0
    %216 = vmatprep.subr.bf16.mxu0 0
    %217 = vmatpush2.bf16.msra.mxu0 0
    %218 = vmatprep.mubr.bf16.mxu0 0
    %219 = vmatmul.mubr.bf16.gmra.mxu0 %v122
    %v220 = vpop.f32.mrf.mxu0
    %v221 = vadd.f32 %v88, %v220
    %v222 = vpop.f32.mrf.mxu0
    %v223 = vpop.f32.mrf.mxu0
    %v224 = vadd.f32 %v88, %v223
    %v225 = vpop.f32.mrf.mxu0
    %226 = vmatprep.mubr.bf16.mxu0 0
    %227 = vmatmul.mubr.bf16.gmra.mxu0 %v123
    %v228 = vpop.f32.mrf.mxu0
    %v229 = vadd.f32 %v88, %v228
    %v230 = vpop.f32.mrf.mxu0
    %v231 = vpop.f32.mrf.mxu0
    %v232 = vadd.f32 %v88, %v231
    %v233 = vpop.f32.mrf.mxu0
    %234 = vmatprep.mubr.bf16.mxu0 0
    %235 = vmatmul.mubr.bf16.gmra.mxu0 %v124
    %v236 = vpop.f32.mrf.mxu0
    %v237 = vadd.f32 %v88, %v236
    %v238 = vpop.f32.mrf.mxu0
    %v239 = vpop.f32.mrf.mxu0
    %v240 = vadd.f32 %v88, %v239
    %v241 = vpop.f32.mrf.mxu0
    %242 = vmatprep.mubr.bf16.mxu0 0
    %243 = vmatmul.mubr.bf16.gmra.mxu0 %v125
    %v244 = vpop.f32.mrf.mxu0
    %v245 = vadd.f32 %v88, %v244
    %v246 = vpop.f32.mrf.mxu0
    %v247 = vpop.f32.mrf.mxu0
    %v248 = vadd.f32 %v88, %v247
    %v249 = vpop.f32.mrf.mxu0
    %250 = vmatprep.mubr.bf16.mxu0 0
    %251 = vmatmul.mubr.bf16.gmra.mxu0 %v126
    %v252 = vpop.f32.mrf.mxu0
    %v253 = vadd.f32 %v88, %v252
    %v254 = vpop.f32.mrf.mxu0
    %v255 = vpop.f32.mrf.mxu0
    %v256 = vadd.f32 %v88, %v255
    %v257 = vpop.f32.mrf.mxu0
    %258 = vmatprep.mubr.bf16.mxu0 0
    %259 = vmatmul.mubr.bf16.gmra.mxu0 %v127
    %v260 = vpop.f32.mrf.mxu0
    %v261 = vadd.f32 %v88, %v260
    %v262 = vpop.f32.mrf.mxu0
    %v263 = vpop.f32.mrf.mxu0
    %v264 = vadd.f32 %v88, %v263
    %v265 = vpop.f32.mrf.mxu0
    %266 = vmatprep.mubr.bf16.mxu0 0
    %267 = vmatmul.mubr.bf16.gmra.mxu0 %v128
    %v268 = vpop.f32.mrf.mxu0
    %v269 = vadd.f32 %v88, %v268
    %v270 = vpop.f32.mrf.mxu0
    %v271 = vpop.f32.mrf.mxu0
    %v272 = vadd.f32 %v88, %v271
    %v273 = vpop.f32.mrf.mxu0
    %274 = vmatprep.mubr.bf16.mxu0 0
    %275 = vmatmul.mubr.bf16.gmra.mxu0 %v129
    %v276 = vpop.f32.mrf.mxu0
    %v277 = vadd.f32 %v88, %v276
    %v278 = vpop.f32.mrf.mxu0
    %v279 = vpop.f32.mrf.mxu0
    %v280 = vadd.f32 %v88, %v279
    %v281 = vpop.f32.mrf.mxu0
    %282 = vdwg.mxu0
    %v283 = vmax.f32 %v221, 0.0
    %v284 = vmax.f32 %v224, 0.0
    %v285 = vmax.f32 %v229, 0.0
    %v286 = vmax.f32 %v232, 0.0
    %v287 = vmax.f32 %v237, 0.0
    %v288 = vmax.f32 %v240, 0.0
    %v289 = vmax.f32 %v245, 0.0
    %v290 = vmax.f32 %v248, 0.0
    %v291 = vmax.f32 %v253, 0.0
    %v292 = vmax.f32 %v256, 0.0
    %v293 = vmax.f32 %v261, 0.0
    %v294 = vmax.f32 %v264, 0.0
    %v295 = vmax.f32 %v269, 0.0
    %v296 = vmax.f32 %v272, 0.0
    %v297 = vmax.f32 %v277, 0.0
    %v298 = vmax.f32 %v280, 0.0
    %v299 = vpack.c.bf16 %v284, %v283
    %v300 = vpack.c.bf16 %v286, %v285
    %v301 = vpack.c.bf16 %v288, %v287
    %v302 = vpack.c.bf16 %v290, %v289
    %v303 = vpack.c.bf16 %v292, %v291
    %v304 = vpack.c.bf16 %v294, %v293
    %v305 = vpack.c.bf16 %v296, %v295
    %v306 = vpack.c.bf16 %v298, %v297
    %v307 = vld [vmem:[%s3] sm:$0x1]
    %s308 = sld [smem:[#allocation2]]
    %v309 = vstv %s308
    %310 = vmatprep.subr.bf16.mxu0 0
    %311 = vmatpush1.bf16.xpose.msra.mxu0 %v306
    %312 = vmatprep.subr.bf16.mxu0 0
    %313 = vmatpush1.bf16.xpose.msra.mxu0 %v305
    %314 = vmatprep.subr.bf16.mxu0 0
    %315 = vmatpush1.bf16.xpose.msra.mxu0 %v304
    %316 = vmatprep.subr.bf16.mxu0 0
    %317 = vmatpush1.bf16.xpose.msra.mxu0 %v303
    %318 = vmatprep.subr.bf16.mxu0 0
    %319 = vmatpush1.bf16.xpose.msra.mxu0 %v302
    %320 = vmatprep.subr.bf16.mxu0 0
    %321 = vmatpush1.bf16.xpose.msra.mxu0 %v301
    %322 = vmatprep.subr.bf16.mxu0 0
    %323 = vmatpush1.bf16.xpose.msra.mxu0 %v300
    %324 = vmatprep.subr.bf16.mxu0 0
    %325 = vmatpush1.bf16.xpose.msra.mxu0 %v299
    %326 = vmatprep.subr.bf16.mxu0 0
    %327 = vmatpush2.bf16.xpose.msra.mxu0 0
    %328 = vmatprep.subr.bf16.mxu0 0
    %329 = vmatpush2.bf16.xpose.msra.mxu0 0
    %330 = vmatprep.subr.bf16.mxu0 0
    %331 = vmatpush2.bf16.xpose.msra.mxu0 0
    %332 = vmatprep.subr.bf16.mxu0 0
    %333 = vmatpush2.bf16.xpose.msra.mxu0 0
    %334 = vmatprep.subr.bf16.mxu0 0
    %335 = vmatpush2.bf16.xpose.msra.mxu0 0
    %336 = vmatprep.subr.bf16.mxu0 0
    %337 = vmatpush2.bf16.xpose.msra.mxu0 0
    %338 = vmatprep.subr.bf16.mxu0 0
    %339 = vmatpush2.bf16.xpose.msra.mxu0 0
    %340 = vmatprep.subr.bf16.mxu0 0
    %341 = vmatpush2.bf16.xpose.msra.mxu0 0
    %342 = vmatprep.mubr.bf16.mxu0 0
    %343 = vmatmul.mubr.bf16.gmra.mxu0 %v307
    %v344 = vpop.f32.mrf.mxu0
    %v345 = vadd.f32 %v309, %v344
    %v346 = vpop.f32.mrf.mxu0
    %v347 = vpop.f32.mrf.mxu0
    %v348 = vpop.f32.mrf.mxu0
    %349 = vdwg.mxu0
    %v350 = vsub.f32 0.0, %v345
    %v351 = vmul.f32 %v350, 1.442695
    %v352 = vpow.pop %v351
    %v353 = vadd.f32 %v352, 1.0
    %v354 = vrcp.pop %v353
    %355 = vst [vmem:[#allocation8] sm:$0x1] %v354
    // Predicated region
    $region30: #{tpu_custom_call.1} parent=1 // pred_check
      _
    $region31: #{tpu_custom_call.1} parent=1 // pred_check_branch
      %357 = sbr.rel (0) target = $region33
    $region32: #{tpu_custom_call.1} parent=1 // pred_region
      %s359 = ssub.s32 16, 16
      %360 = vsyncadd [#allocation5], %s359
      %s362 = sshll.u32 [#allocation8], 4
      %s363 = int_to_ptr.vmem [resolvable:$true] %s362
      %365 = dma.vmem_to_hbm [thread:$0]  %s363, 16, %s5, [#allocation5]
    $region33: #{tpu_custom_call.1} parent=1 // pred_fallthru
      _
    // Predicated region
    $region34: #{tpu_custom_call.1} parent=1 // pred_check
      _
    $region35: #{tpu_custom_call.1} parent=1 // pred_check_branch
      %367 = sbr.rel (0) target = $region37
    $region36: #{tpu_custom_call.1} parent=1 // pred_region
      %368 = dma.done [#allocation5], 16
    $region37: #{tpu_custom_call.1} parent=1 // pred_fallthru
      _
    %369 = vsyncpa [#allocation4], 1
    %370 = vsyncpa [#allocation7], 1
    %371 = vsyncpa [#allocation5], 1

</llo_original>
